<compile_context>
chip_gen: v5e
topology: v5e:2x2
jax: 0.10.0
libtpu: 0.0.40
codegen_flags: <defaults>
</compile_context>

<pallas_src>
import functools

import numpy as np

import jax
import jax.numpy as jnp
from jax.experimental import pallas as pl
from jax.experimental.pallas import tpu as pltpu


# ---------------------------------------------------------------------------
# pltpu.roll direction probe (run once, cached, eager).
# We need result[p] = x[p + d]; the probe resolves the rotation convention of
# the installed jax/Mosaic so the conv tap shifts are correct.
# ---------------------------------------------------------------------------
@functools.lru_cache(maxsize=None)
def _pltpu_roll_matches_jnp_roll() -> bool:
    def probe(x_ref, o_ref):
        o_ref[...] = pltpu.roll(x_ref[...], shift=1, axis=1)

    x = jax.lax.broadcasted_iota(jnp.float32, (8, 128), 1)
    y = pl.pallas_call(
        probe, out_shape=jax.ShapeDtypeStruct((8, 128), jnp.float32))(x)
    # jnp.roll(x, 1, axis=1)[..., 0] == x[..., -1] == 127
    return int(jax.device_get(y)[0, 0]) == 127


# ---------------------------------------------------------------------------
# Fused Body kernel
# ---------------------------------------------------------------------------
def _body_kernel(x_ref, m_ref, w0_ref,
                 c1w_ref, c1b_ref, c2w_ref, c2b_ref,
                 f1w_ref, f1b_ref, f2w_ref, f2b_ref,
                 y_ref, *, shifts, needs_mask, n_fold, hw):
    # One grid step == one group of `n_fold` images folded into lanes.
    #   x_ref : (1, Cin_p, L) f32     L = n_fold * hw
    #   m_ref : (9, 1, L)     f32     per-tap border masks (0/1)
    #   w0_ref: (3, C, 3*Cin_p) bf16  initial conv, per-kernel-row im2col slabs
    #   c*w   : (B, 3, C, 3*C)  bf16  block conv weights (row slabs)
    #   c*b   : (B, C, 1)       f32
    #   f1w   : (B, C, Se) f32 ; f1b : (B, 1, Se) f32
    #   f2w   : (B, 2C, Se) f32 (pre-transposed) ; f2b : (B, 2C, 1) f32
    #   y_ref : (1, C, L)
    C = y_ref.shape[1]
    L = y_ref.shape[2]
    n_blocks = c1w_ref.shape[0]

    # Hoisted: tap masks + per-image lane indicators (reused by every block).
    masks = [m_ref[t] for t in range(9)]                       # (1, L) f32
    lane = jax.lax.broadcasted_iota(jnp.int32, (1, L), 1)
    img_ind = [((lane >= g * hw) & (lane < (g + 1) * hw)).astype(jnp.float32)
               for g in range(n_fold)]

    def conv3x3_relu(x, row_w, b_col=None):
        # x: (Cin, L) f32 ; row_w(r) -> (Cout, 3*Cin) bf16 ; b_col: (Cout,1)|None
        # Three accumulated bf16 MXU dots (one per kernel row): K = 3*Cin each,
        # so the live im2col patch stays small (no f32 spill).
        acc = None
        for r in range(3):
            cols = []
            for dx in range(3):
                t = r * 3 + dx
                s = shifts[t]
                tap = pltpu.roll(x, shift=s, axis=1) if s else x
                if needs_mask[t]:
                    tap = tap * masks[t]          # zero the padding taps (f32)
                cols.append(tap.astype(jnp.bfloat16))
            patch = jnp.concatenate(cols, axis=0)              # (3*Cin, L) bf16
            part = jnp.dot(row_w(r), patch,
                           preferred_element_type=jnp.float32)  # (Cout, L) f32
            acc = part if acc is None else acc + part
        if b_col is not None:
            acc = acc + b_col
        return jnp.maximum(acc, 0.0)                           # every conv -> ReLU

    # Initial conv (bias=False in the module).
    x = conv3x3_relu(x_ref[0].astype(jnp.float32), lambda r: w0_ref[r])

    # Residual tower. B is small -> static unroll; see TODO(synk) above for
    # the lax.fori_loop variant once the tower grows.
    for i in range(n_blocks):
        out = conv3x3_relu(x, lambda r, i=i: c1w_ref[i, r], c1b_ref[i])
        out = conv3x3_relu(out, lambda r, i=i: c2w_ref[i, r], c2b_ref[i])

        # ---- SE layer: per image of the folded lane group, f32 on the VPU ----
        scale_full = None
        shift_full = None
        for g in range(n_fold):
            out_g = out[:, g * hw:(g + 1) * hw]                       # (C, hw)
            pooled = jnp.mean(out_g, axis=1, keepdims=True)           # (C, 1)
            h = jnp.sum(f1w_ref[i] * pooled, axis=0, keepdims=True)   # (1, Se)
            h = jnp.maximum(h + f1b_ref[i], 0.0)
            f = jnp.sum(f2w_ref[i] * h, axis=1, keepdims=True) + f2b_ref[i]
            sc = jax.nn.sigmoid(f[:C, :])                             # (C, 1)
            sh = f[C:, :]                                             # (C, 1)
            if n_fold == 1:
                scale_full, shift_full = sc, sh
            else:
                sc_l = sc * img_ind[g]                                # (C, L)
                sh_l = sh * img_ind[g]
                scale_full = sc_l if scale_full is None else scale_full + sc_l
                shift_full = sh_l if shift_full is None else shift_full + sh_l

        # SE gate + residual add + ReLU, fused, full lane width, f32.
        x = jnp.maximum(out * scale_full + shift_full + x, 0.0)

    y_ref[0] = x.astype(y_ref.dtype)


def _conv_w_rows(w, cin_pad=0):
    """(3, 3, Cin, Cout) HWIO -> (3, Cout, 3*Cin) bf16 per-kernel-row slabs."""
    if cin_pad:
        w = jnp.pad(w, ((0, 0), (0, 0), (0, cin_pad), (0, 0)))
    k1, k2, cin, cout = w.shape
    w = w.reshape(k1, k2 * cin, cout)             # (3, 3*Cin, Cout), (kx,cin) order
    return jnp.transpose(w, (0, 2, 1)).astype(jnp.bfloat16)


# ---------------------------------------------------------------------------
# Body.forward (NCHW in / NCHW out)
# ---------------------------------------------------------------------------
@functools.partial(jax.jit, static_argnames=("roll_like_jnp", "images_per_step"))
def _body_forward_jit(x_nchw, params, *, roll_like_jnp, images_per_step):
    N, Cin, H, W = x_nchw.shape
    HW = H * W
    n_fold = images_per_step
    assert N % n_fold == 0, "images_per_step must divide the batch"
    G = N // n_fold
    L = n_fold * HW
    C = params["conv_w"].shape[-1]
    blks = params["blocks"]
    B = len(blks)
    Se = blks[0]["fc1_w"].shape[1]

    # --- activations: channels on sublanes, n_fold images folded into lanes ---
    Cin_p = -(-Cin // 8) * 8
    x = x_nchw.astype(jnp.float32).reshape(G, n_fold, Cin, HW)
    x = jnp.transpose(x, (0, 2, 1, 3)).reshape(G, Cin, L)
    if Cin_p != Cin:
        x = jnp.pad(x, ((0, 0), (0, Cin_p - Cin), (0, 0)))

    # --- static per-tap lane shifts + border masks (numpy -> static config) ---
    pos = np.arange(HW)
    col = pos % W
    row = pos // W
    shifts, needs_mask, mask_list = [], [], []
    for dy in range(3):
        for dx in range(3):
            ky, kx = dy - 1, dx - 1
            d = ky * W + kx                      # want: result[p] = x[p + d]
            shifts.append(int(((-d) if roll_like_jnp else d) % L))
            m = ((col + kx >= 0) & (col + kx < W) &
                 (row + ky >= 0) & (row + ky < H))
            needs_mask.append(not bool(m.all()))           # skip all-ones masks
            mask_list.append(np.tile(m, n_fold))           # tile per image
    tap_masks = jnp.asarray(
        np.stack(mask_list).astype(np.float32).reshape(9, 1, L))

    # --- weights: bf16 per-row im2col conv slabs, f32 biases / SE params ---
    w0 = _conv_w_rows(params["conv_w"], cin_pad=Cin_p - Cin)        # (3,C,3Cin_p)
    c1w = jnp.stack([_conv_w_rows(b["conv1_w"]) for b in blks])     # (B,3,C,3C)
    c1b = jnp.stack([b["conv1_b"].reshape(C, 1) for b in blks])     # (B,C,1)
    c2w = jnp.stack([_conv_w_rows(b["conv2_w"]) for b in blks])
    c2b = jnp.stack([b["conv2_b"].reshape(C, 1) for b in blks])
    f1w = jnp.stack([b["fc1_w"] for b in blks])                     # (B,C,Se)
    f1b = jnp.stack([b["fc1_b"].reshape(1, Se) for b in blks])      # (B,1,Se)
    f2w = jnp.stack([jnp.transpose(b["fc2_w"]) for b in blks])      # (B,2C,Se)
    f2b = jnp.stack([b["fc2_b"].reshape(2 * C, 1) for b in blks])   # (B,2C,1)

    kernel = functools.partial(_body_kernel, shifts=tuple(shifts),
                               needs_mask=tuple(needs_mask),
                               n_fold=n_fold, hw=HW)

    y = pl.pallas_call(
        kernel,
        out_shape=jax.ShapeDtypeStruct((G, C, L), x_nchw.dtype),
        grid_spec=pltpu.PrefetchScalarGridSpec(
            num_scalar_prefetch=0,
            grid=(G,),
            in_specs=[
                pl.BlockSpec((1, Cin_p, L), lambda g: (g, 0, 0)),
                pl.BlockSpec((9, 1, L), lambda g: (0, 0, 0)),
                pl.BlockSpec((3, C, 3 * Cin_p), lambda g: (0, 0, 0)),
                pl.BlockSpec((B, 3, C, 3 * C), lambda g: (0, 0, 0, 0)),
                pl.BlockSpec((B, C, 1), lambda g: (0, 0, 0)),
                pl.BlockSpec((B, 3, C, 3 * C), lambda g: (0, 0, 0, 0)),
                pl.BlockSpec((B, C, 1), lambda g: (0, 0, 0)),
                pl.BlockSpec((B, C, Se), lambda g: (0, 0, 0)),
                pl.BlockSpec((B, 1, Se), lambda g: (0, 0, 0)),
                pl.BlockSpec((B, 2 * C, Se), lambda g: (0, 0, 0)),
                pl.BlockSpec((B, 2 * C, 1), lambda g: (0, 0, 0)),
            ],
            out_specs=pl.BlockSpec((1, C, L), lambda g: (g, 0, 0)),
        ),
        compiler_params=pltpu.CompilerParams(
            dimension_semantics=("parallel",),
            vmem_limit_bytes=32 * 1024 * 1024),
    )(x, tap_masks, w0, c1w, c1b, c2w, c2b, f1w, f1b, f2w, f2b)

    # (G, C, n_fold*HW) -> (N, C, H, W)
    y = y.reshape(G, C, n_fold, HW)
    return jnp.transpose(y, (0, 2, 1, 3)).reshape(N, C, H, W)


def body_forward(x_nchw, params, images_per_step=None):
    """Body.forward.  `images_per_step` = how many images are folded into the
    MXU lane dimension per grid step.  Default: all of them (grid=(1,) — best
    for single-TensorCore v5e/v6e).  On v7x use images_per_step = N // 2 so
    both TensorCores get a 'parallel' grid step."""
    roll_like_jnp = _pltpu_roll_matches_jnp_roll()      # eager, cached probe
    n = x_nchw.shape[0]
    ips = n if images_per_step is None else images_per_step
    return _body_forward_jit(x_nchw, params,
                             roll_like_jnp=roll_like_jnp, images_per_step=ips)


# ---------------------------------------------------------------------------
# Parameter init (deterministic, synthetic; conv weights in HWIO layout)
# ---------------------------------------------------------------------------
def init_body_params(key, input_channels, filters, blocks, se_channels):
    def uniform(k, shape, fan_in):
        bound = 1.0 / jnp.sqrt(jnp.float32(fan_in))
        return jax.random.uniform(k, shape, jnp.float32, -bound, bound)

    keys = jax.random.split(key, 1 + blocks)
    params = {
        # initial conv has bias=False in the PyTorch module
        "conv_w": uniform(keys[0], (3, 3, input_channels, filters),
                          9 * input_channels),
        "blocks": [],
    }
    for i in range(blocks):
        ks = jax.random.split(keys[1 + i], 8)
        params["blocks"].append({
            "conv1_w": uniform(ks[0], (3, 3, filters, filters), 9 * filters),
            "conv1_b": uniform(ks[1], (filters,), 9 * filters),
            "conv2_w": uniform(ks[2], (3, 3, filters, filters), 9 * filters),
            "conv2_b": uniform(ks[3], (filters,), 9 * filters),
            "fc1_w": uniform(ks[4], (filters, se_channels), filters),
            "fc1_b": uniform(ks[5], (se_channels,), filters),
            "fc2_w": uniform(ks[6], (se_channels, 2 * filters), se_channels),
            "fc2_b": uniform(ks[7], (2 * filters,), se_channels),
        })
    return params


# ---------------------------------------------------------------------------
# Pure-JAX reference (f32 or bf16 conv operands, f32 accumulation)
# ---------------------------------------------------------------------------
def _ref_conv3x3_relu(x, w, b=None, conv_dtype=jnp.float32):
    y = jax.lax.conv_general_dilated(
        x.astype(conv_dtype), w.astype(conv_dtype),
        window_strides=(1, 1), padding=((1, 1), (1, 1)),
        dimension_numbers=("NHWC", "HWIO", "NHWC"),
        preferred_element_type=jnp.float32,
        precision=jax.lax.Precision.HIGHEST)
    if b is not None:
        y = y + b
    return jnp.maximum(y, 0.0)


def _ref_body(x_nchw, params, conv_dtype=jnp.float32):
    x = jnp.transpose(x_nchw, (0, 2, 3, 1)).astype(jnp.float32)
    x = _ref_conv3x3_relu(x, params["conv_w"], None, conv_dtype)
    for blk in params["blocks"]:
        out = _ref_conv3x3_relu(x, blk["conv1_w"], blk["conv1_b"], conv_dtype)
        out = _ref_conv3x3_relu(out, blk["conv2_w"], blk["conv2_b"], conv_dtype)
        pooled = jnp.mean(out, axis=(1, 2))
        h = jnp.maximum(pooled @ blk["fc1_w"] + blk["fc1_b"], 0.0)
        f = h @ blk["fc2_w"] + blk["fc2_b"]
        C = out.shape[-1]
        wsc = jax.nn.sigmoid(f[:, :C])[:, None, None, :]
        bsh = f[:, C:][:, None, None, :]
        x = jnp.maximum(out * wsc + bsh + x, 0.0)
    return jnp.transpose(x, (0, 3, 1, 2))


# ---------------------------------------------------------------------------
if __name__ == "__main__":
    # Body(input_channels=4, filters=32, blocks=2, se_channels=8),
    # input (N=2, C=4, H=16, W=16).
    INPUT_CHANNELS, FILTERS, BLOCKS, SE_CHANNELS = 4, 32, 2, 8
    N, H, W = 2, 16, 16

    key = jax.random.PRNGKey(0)
    k_x, k_p = jax.random.split(key)
    x = jax.random.normal(k_x, (N, INPUT_CHANNELS, H, W), jnp.float32)
    params = init_body_params(k_p, INPUT_CHANNELS, FILTERS, BLOCKS, SE_CHANNELS)

    y = jax.block_until_ready(body_forward(x, params))
    assert y.shape == (N, FILTERS, H, W)

    # Tight check vs a reference using the same bf16 MXU operands (verifies
    # kernel structure: taps, masks, SE, residual) ...
    y_mix = jax.block_until_ready(_ref_body(x, params, conv_dtype=jnp.bfloat16))
    assert jnp.allclose(y, y_mix, atol=1e-2, rtol=1e-2), \
        "mismatch vs bf16-matmul reference"
    # ... and a loose norm check vs the pure-f32 reference (bounds bf16 drift).
    y_f32 = jax.block_until_ready(_ref_body(x, params, conv_dtype=jnp.float32))
    rel = float(jnp.linalg.norm(y - y_f32) / jnp.linalg.norm(y_f32))
    assert rel < 3e-2, f"bf16 drift vs f32 reference too large: {rel}"

    print("KERNEL_OK")
</pallas_src>

<mosaic_0001>
module attributes {stable_mosaic.version = 11 : i64} {
  func.func @probe(%arg0: memref<8x128xf32, #tpu.memory_space<vmem>>, %arg1: memref<8x128xf32, #tpu.memory_space<vmem>>) attributes {dimension_semantics = [], scalar_prefetch = 0 : i64, scratch_operands = 0 : i64, tpu.core_type = #tpu.core_type<tc>} {
    %c0 = arith.constant 0 : index
    %c0_0 = arith.constant 0 : index
    %0 = vector.load %arg0[%c0, %c0_0] : memref<8x128xf32, #tpu.memory_space<vmem>>, vector<8x128xf32>
    %c1_i32 = arith.constant 1 : i32
    %1 = tpu.dynamic_rotate %0 by %c1_i32 dim 1 : vector<8x128xf32>, i32 -> vector<8x128xf32>
    %c0_1 = arith.constant 0 : index
    %c0_2 = arith.constant 0 : index
    %2 = vector.load %arg1[%c0_1, %c0_2] : memref<8x128xf32, #tpu.memory_space<vmem>>, vector<8x128xf32>
    tpu.vector_store %arg1[%c0_1, %c0_2], %1 {strides = array<i32>} : memref<8x128xf32, #tpu.memory_space<vmem>>, vector<8x128xf32>,
    return
  }
}

</mosaic_0001>

<llo_original>
// kernel: tpu_custom_call.1
$region0: #{tpu_custom_call.1}
  #allocation0 [shape = 'u32[]', space=smem, size = 0x4, offset = 0x4, fixed_abs, tag = 'smem constant byte address 0x4 - core index']
  #allocation1 [shape = 'u32[72,128]{1,0:T(1,128)}', space=vmem, size = 0x9000, scoped, tag = 'internal scratch']
  %s0 = inlined_call_operand.hbm [shape: f32[8,128], index: 0, kind: input, shape index: {}]
  %s1 = inlined_call_operand.hbm [shape: f32[8,128], index: 1, kind: output, shape index: {}]
  %s2 = sld [smem:[#allocation0]]
  $region18: #{tpu_custom_call.1} parent=0
    _
  %s4 = ssub.s32 1, %s2
  %s5 = scalar_select 0, %s4, %s2
  $region1: #{tpu_custom_call.1} parent=0
    #allocation2 [shape = 'u8[4096]{0}', space=vmem, size = 0x1000, scoped, tag = 'input window, operand 0, single buffered']
    #allocation3 [shape = 's32[1]{0}', space=sflag, size = 0x4, scoped, tag = 'scoped memory for tpu_custom_call.1']
    #allocation4 [shape = 's32[1]{0}', space=sflag, size = 0x4, scoped, tag = 'scoped memory for tpu_custom_call.1']
    #allocation5 [shape = 'u8[4096]{0}', space=vmem, size = 0x1000, scoped, tag = 'output window, operand 0, single buffered']
    %6 = vsyncpa [#allocation3], 0
    %7 = vsyncpa [#allocation4], 0
    // Predicated region
    $region2: #{tpu_custom_call.1} parent=1 // pred_check
      _
    $region3: #{tpu_custom_call.1} parent=1 // pred_check_branch
      %9 = sbr.rel (0) target = $region5
    $region4: #{tpu_custom_call.1} parent=1 // pred_region
      %11 = vsyncadd [#allocation3], 0
      %s13 = sshll.u32 %s0, 4
      %s14 = int_to_ptr.hbm [resolvable:$true] %s13
      %s15 = sshll.u32 [#allocation2], 4
      %s16 = int_to_ptr.vmem [resolvable:$true] %s15
      %18 = dma.hbm_to_vmem [thread:$0]  %s14, 128, %s16, [#allocation3]
    $region5: #{tpu_custom_call.1} parent=1 // pred_fallthru
      _
    // Predicated region
    $region6: #{tpu_custom_call.1} parent=1 // pred_check
      _
    $region7: #{tpu_custom_call.1} parent=1 // pred_check_branch
      %20 = sbr.rel (0) target = $region9
    $region8: #{tpu_custom_call.1} parent=1 // pred_region
      %22 = dma.done [#allocation3], 128
    $region9: #{tpu_custom_call.1} parent=1 // pred_fallthru
      _
    %v23 = vld [vmem:[#allocation2] sm:$0xff]
    %24 = vrot.lane.b32.xlu0 %v23, 1
    %v25 = vpop.permute.xlu0 %24
    %26 = vst [vmem:[#allocation5] sm:$0xff] %v25
    // Predicated region
    $region10: #{tpu_custom_call.1} parent=1 // pred_check
      _
    $region11: #{tpu_custom_call.1} parent=1 // pred_check_branch
      %28 = sbr.rel (0) target = $region13
    $region12: #{tpu_custom_call.1} parent=1 // pred_region
      %30 = vsyncadd [#allocation4], 0
      %s32 = sshll.u32 [#allocation5], 4
      %s33 = int_to_ptr.vmem [resolvable:$true] %s32
      %s34 = sshll.u32 %s1, 4
      %s35 = int_to_ptr.hbm [resolvable:$true] %s34
      %37 = dma.vmem_to_hbm [thread:$0]  %s33, 128, %s35, [#allocation4]
    $region13: #{tpu_custom_call.1} parent=1 // pred_fallthru
      _
    // Predicated region
    $region14: #{tpu_custom_call.1} parent=1 // pred_check
      _
    $region15: #{tpu_custom_call.1} parent=1 // pred_check_branch
      %39 = sbr.rel (0) target = $region17
    $region16: #{tpu_custom_call.1} parent=1 // pred_region
      %41 = dma.done [#allocation4], 128
    $region17: #{tpu_custom_call.1} parent=1 // pred_fallthru
      _
    %42 = vsyncpa [#allocation3], 1
    %43 = vsyncpa [#allocation4], 1

</llo_original>
